<compile_context>
chip_gen: v5e
topology: v5e:2x2
jax: 0.10.0
libtpu: 0.0.40
codegen_flags: <defaults>
</compile_context>

<pallas_src>
import jax
import jax.numpy as jnp
from jax.experimental import pallas as pl
from jax.experimental.pallas import tpu as pltpu


def attention_block_kernel(x_ref, wqT_ref, bq_ref, wkT_ref, bk_ref, wvT_ref, bv_ref,
                           gamma_ref, out_ref, attn_ref, k_scr, v_scr):
    # x_ref    : (Bt, 1, L)   batch-row tile, row form (lane axis = L)
    # wqT_ref  : (L, Lq)      Wq^T block for this query tile (q = x @ Wq^T + bq)
    # bq_ref   : (1, Lq)
    # wkT_ref  : (L, L)  bk_ref: (1, L)
    # wvT_ref  : (L, L)  bv_ref: (1, L)
    # gamma_ref: (1, 1)       SMEM scalar
    # out_ref  : (Bt, 1, Lq)  lane-dense output tile (gamma*attn@v + x)
    # attn_ref : (Bt, Lq, L)  lane-dense attention tile
    # k_scr/v_scr: (Bt, L) f32 scratch (reused across query tiles)
    L = x_ref.shape[-1]
    Lq = bq_ref.shape[-1]
    scale = 1.0 / (L ** 0.5)

    x = x_ref[:, 0, :]                                              # (Bt, L)

    if Lq == L:
        # Single query tile per batch tile: compute K/V directly (no scratch round trip).
        k = jnp.dot(x, wkT_ref[...], preferred_element_type=jnp.float32) + bk_ref[...]
        v = jnp.dot(x, wvT_ref[...], preferred_element_type=jnp.float32) + bv_ref[...]
        x_res = x
    else:
        qi = pl.program_id(1)

        @pl.when(qi == 0)       # K/V GEMMs once per batch tile, reused for every q-tile
        def _():
            k_scr[...] = jnp.dot(x, wkT_ref[...],
                                 preferred_element_type=jnp.float32) + bk_ref[...]
            v_scr[...] = jnp.dot(x, wvT_ref[...],
                                 preferred_element_type=jnp.float32) + bv_ref[...]

        k = k_scr[...]                                              # (Bt, L)
        v = v_scr[...]                                              # (Bt, L)
        q_start = pl.multiple_of(qi * Lq, 128)
        x_res = x_ref[:, 0, pl.ds(q_start, Lq)]                     # residual slice

    # Q projection for this query tile: real (Bt, L) @ (L, Lq) GEMM, pre-scaled 1/sqrt(L).
    q = (jnp.dot(x, wqT_ref[...], preferred_element_type=jnp.float32)
         + bq_ref[...]) * scale                                     # (Bt, Lq)

    # Rank-1 softmax row max: max_j(q_i*k_j) = q_i*max(k) if q_i >= 0 else q_i*min(k).
    k_max = jnp.max(k, axis=-1, keepdims=True)[:, :, None]          # (Bt, 1, 1)
    k_min = jnp.min(k, axis=-1, keepdims=True)[:, :, None]          # (Bt, 1, 1)
    q_col = q[:, :, None]                                           # (Bt, Lq, 1)
    m = jnp.where(q_col >= 0, q_col * k_max, q_col * k_min)         # (Bt, Lq, 1)

    # Stable softmax of the rank-1 logits q_i * k_j (VPU outer product + EUP exp).
    p = jnp.exp(q_col * k[:, None, :] - m)                          # (Bt, Lq, L)
    s = jnp.sum(p, axis=-1, keepdims=True)                          # (Bt, Lq, 1)
    attn = p * pl.reciprocal(s, approx=False)                       # exact for parity
    attn_ref[...] = attn.astype(attn_ref.dtype)

    # out[b,i] = gamma * sum_j attn[b,i,j]*v[b,j] + x[b,i]   (lane-dense store).
    av = jnp.sum(attn * v[:, None, :], axis=-1)                     # (Bt, Lq)
    out_ref[:, 0, :] = (gamma_ref[0, 0] * av + x_res).astype(out_ref.dtype)


def _choose_tiles(B, L, attn_itemsize):
    """Pick (Bt, Lq) so the per-grid-step VMEM working set fits a v7x-safe budget."""
    budget = 48 * 1024 * 1024                       # conservative vs 64 MiB physical on v7x
    weights = 3 * L * L * 4 * 2 + 3 * L * 4 * 2     # q/k/v weights+biases, double-buffered

    def per_row(lq):    # per batch row: logits/exp intermediates + attn out block + x/out
        return lq * L * (2 * 4 + 2 * attn_itemsize) + 4 * L * 4

    # Query tile: full L when it fits; otherwise the largest 128-multiple divisor of L.
    Lq = L
    if weights + per_row(L) > budget and L % 128 == 0:
        Lq = 128
        for cand in range(L - 128, 0, -128):
            if L % cand == 0 and weights + per_row(cand) <= budget:
                Lq = cand
                break

    # Batch tile: as many rows per step as fit the remaining budget.
    avail = budget - weights
    Bt = 1 if avail < per_row(Lq) else min(B, avail // per_row(Lq), 512)
    Bt = max(1, int(Bt))

    # v7x has 2 TensorCores: keep >= 2 parallel grid steps when there is real work.
    if Bt >= B and B > 1 and B * L * L * attn_itemsize > (1 << 20):
        Bt = pl.cdiv(B, 2)
    return Bt, Lq


def attention_block(x, wq, bq, wk, bk, wv, bv, gamma, *, attn_dtype=None):
    """x: (B, L); W*: (L, L) torch nn.Linear weights (out, in); b*: (L,); gamma: (1,).

    attn_dtype: dtype of the returned attention tensor (default x.dtype). Pass
    jnp.bfloat16 to halve the dominant HBM-write traffic when exact parity is not needed.
    """
    B, L = x.shape
    dtype = x.dtype
    attn_dtype = jnp.dtype(dtype if attn_dtype is None else attn_dtype)

    Bt, Lq = _choose_tiles(B, L, attn_dtype.itemsize)
    grid = (pl.cdiv(B, Bt), L // Lq)

    x3 = x.reshape(B, 1, L)                         # single row-form x stream (no column copy)
    wqT, wkT, wvT = wq.T, wk.T, wv.T                # q = x @ Wq^T + bq, etc.
    bq_r = bq.reshape(1, L)
    bk_r = bk.reshape(1, L)
    bv_r = bv.reshape(1, L)
    gamma2 = gamma.reshape(1, 1)

    # Derive the VMEM limit from actual tile sizes (instead of a hard-coded constant).
    weights_bytes = (2 * L * L + L * Lq) * 4 * 2 + (2 * L + Lq) * 4 * 2
    per_row_bytes = Lq * L * (2 * 4 + 2 * attn_dtype.itemsize) + 4 * L * 4
    vmem_limit = int(min(64 << 20,
                         max(16 << 20, weights_bytes + Bt * per_row_bytes + (4 << 20))))

    out3, attn = pl.pallas_call(
        attention_block_kernel,
        grid=grid,
        in_specs=[
            pl.BlockSpec((Bt, 1, L), lambda b, q: (b, 0, 0)),       # x (row form)
            pl.BlockSpec((L, Lq), lambda b, q: (0, q)),             # Wq^T (query-tiled)
            pl.BlockSpec((1, Lq), lambda b, q: (0, q)),             # bq
            pl.BlockSpec((L, L), lambda b, q: (0, 0)),              # Wk^T
            pl.BlockSpec((1, L), lambda b, q: (0, 0)),              # bk
            pl.BlockSpec((L, L), lambda b, q: (0, 0)),              # Wv^T
            pl.BlockSpec((1, L), lambda b, q: (0, 0)),              # bv
            pl.BlockSpec(memory_space=pltpu.MemorySpace.SMEM),      # gamma scalar
        ],
        out_specs=(
            pl.BlockSpec((Bt, 1, Lq), lambda b, q: (b, 0, q)),      # out (lane-dense)
            pl.BlockSpec((Bt, Lq, L), lambda b, q: (b, q, 0)),      # attention weights
        ),
        out_shape=(
            jax.ShapeDtypeStruct((B, 1, L), dtype),
            jax.ShapeDtypeStruct((B, L, L), attn_dtype),
        ),
        scratch_shapes=[
            pltpu.VMEM((Bt, L), jnp.float32),                       # k scratch
            pltpu.VMEM((Bt, L), jnp.float32),                       # v scratch
        ],
        compiler_params=pltpu.CompilerParams(
            dimension_semantics=("parallel", "arbitrary"),
            vmem_limit_bytes=vmem_limit,
        ),
    )(x3, wqT, bq_r, wkT, bk_r, wvT, bv_r, gamma2)

    return out3.reshape(B, L), attn


if __name__ == "__main__":
    B, L = 2, 16   # x is (batch, seq_len), consistent with the module's forward

    key = jax.random.PRNGKey(0)
    kx, kwq, kbq, kwk, kbk, kwv, kbv = jax.random.split(key, 7)

    bound = 1.0 / (L ** 0.5)   # PyTorch nn.Linear default uniform bound
    x = jax.random.normal(kx, (B, L), jnp.float32)
    wq = jax.random.uniform(kwq, (L, L), jnp.float32, -bound, bound)
    bq = jax.random.uniform(kbq, (L,), jnp.float32, -bound, bound)
    wk = jax.random.uniform(kwk, (L, L), jnp.float32, -bound, bound)
    bk = jax.random.uniform(kbk, (L,), jnp.float32, -bound, bound)
    wv = jax.random.uniform(kwv, (L, L), jnp.float32, -bound, bound)
    bv = jax.random.uniform(kbv, (L,), jnp.float32, -bound, bound)
    gamma = jnp.zeros((1,), jnp.float32)   # nn.Parameter(torch.zeros(1))

    out, attn = jax.block_until_ready(
        attention_block(x, wq, bq, wk, bk, wv, bv, gamma)
    )

    # Pure-JAX reference for a correctness spot-check.
    q_r = x @ wq.T + bq
    k_r = x @ wk.T + bk
    v_r = x @ wv.T + bv
    logits = (q_r[:, :, None] * k_r[:, None, :]) / (L ** 0.5)
    attn_r = jax.nn.softmax(logits, axis=-1)
    out_r = gamma.reshape(1, 1) * jnp.einsum("bij,bj->bi", attn_r, v_r) + x

    assert out.shape == (B, L)
    assert attn.shape == (B, L, L)
    assert float(jnp.max(jnp.abs(out - out_r))) < 1e-4
    assert float(jnp.max(jnp.abs(attn - attn_r))) < 1e-4
    print("KERNEL_OK")
</pallas_src>

<mosaic_0001>
module attributes {stable_mosaic.version = 11 : i64} {
  func.func @attention_block_kernel(%arg0: i32, %arg1: i32, %arg2: memref<2x1x16xf32, #tpu.memory_space<vmem>>, %arg3: memref<16x16xf32, #tpu.memory_space<vmem>>, %arg4: memref<1x16xf32, #tpu.memory_space<vmem>>, %arg5: memref<16x16xf32, #tpu.memory_space<vmem>>, %arg6: memref<1x16xf32, #tpu.memory_space<vmem>>, %arg7: memref<16x16xf32, #tpu.memory_space<vmem>>, %arg8: memref<1x16xf32, #tpu.memory_space<vmem>>, %arg9: memref<1x1xf32, #tpu.memory_space<smem>>, %arg10: memref<2x1x16xf32, #tpu.memory_space<vmem>>, %arg11: memref<2x16x16xf32, #tpu.memory_space<vmem>>, %arg12: memref<2x16xf32, #tpu.memory_space<vmem>>, %arg13: memref<2x16xf32, #tpu.memory_space<vmem>>) attributes {dimension_semantics = [#tpu.dimension_semantics<parallel>, #tpu.dimension_semantics<arbitrary>], iteration_bounds = array<i64: 1, 1>, scalar_prefetch = 0 : i64, scratch_operands = 2 : i64, tpu.core_type = #tpu.core_type<tc>, window_params = [{transform_indices = @transform_0, window_bounds = array<i64: 2, 1, 16>}, {transform_indices = @transform_1, window_bounds = array<i64: 16, 16>}, {transform_indices = @transform_2, window_bounds = array<i64: 1, 16>}, {pipeline_mode = #tpu.pipeline_mode<synchronous>, transform_indices = @transform_3, window_bounds = array<i64: 16, 16>}, {pipeline_mode = #tpu.pipeline_mode<synchronous>, transform_indices = @transform_4, window_bounds = array<i64: 1, 16>}, {pipeline_mode = #tpu.pipeline_mode<synchronous>, transform_indices = @transform_5, window_bounds = array<i64: 16, 16>}, {pipeline_mode = #tpu.pipeline_mode<synchronous>, transform_indices = @transform_6, window_bounds = array<i64: 1, 16>}, {transform_indices = @transform_7, window_bounds = array<i64: 1, 1>}, {transform_indices = @transform_8, window_bounds = array<i64: 2, 1, 16>}, {transform_indices = @transform_9, window_bounds = array<i64: 2, 16, 16>}]} {
    %c0 = arith.constant 0 : index
    %c0_0 = arith.constant 0 : index
    %c0_1 = arith.constant 0 : index
    %0 = vector.load %arg2[%c0, %c0_0, %c0_1] : memref<2x1x16xf32, #tpu.memory_space<vmem>>, vector<2x1x16xf32>
    %1 = vector.shape_cast %0 : vector<2x1x16xf32> to vector<2x16xf32>
    %c0_2 = arith.constant 0 : index
    %c0_3 = arith.constant 0 : index
    %2 = vector.load %arg5[%c0_2, %c0_3] : memref<16x16xf32, #tpu.memory_space<vmem>>, vector<16x16xf32>
    %cst = arith.constant dense<0.000000e+00> : vector<2x16xf32>
    %3 = tpu.matmul %1, %2, %cst {dimension_numbers = #tpu.dot_dimension_numbers<[1], [0], [0], [1], [0, 0, 1, 1], [], []>} : vector<2x16xf32>, vector<16x16xf32>, vector<2x16xf32> -> vector<2x16xf32>
    %c0_4 = arith.constant 0 : index
    %c0_5 = arith.constant 0 : index
    %4 = vector.load %arg6[%c0_4, %c0_5] : memref<1x16xf32, #tpu.memory_space<vmem>>, vector<1x16xf32>
    %5 = vector.broadcast %4 : vector<1x16xf32> to vector<2x16xf32>
    %6 = arith.addf %3, %5 : vector<2x16xf32>
    %c0_6 = arith.constant 0 : index
    %c0_7 = arith.constant 0 : index
    %7 = vector.load %arg7[%c0_6, %c0_7] : memref<16x16xf32, #tpu.memory_space<vmem>>, vector<16x16xf32>
    %cst_8 = arith.constant dense<0.000000e+00> : vector<2x16xf32>
    %8 = tpu.matmul %1, %7, %cst_8 {dimension_numbers = #tpu.dot_dimension_numbers<[1], [0], [0], [1], [0, 0, 1, 1], [], []>} : vector<2x16xf32>, vector<16x16xf32>, vector<2x16xf32> -> vector<2x16xf32>
    %c0_9 = arith.constant 0 : index
    %c0_10 = arith.constant 0 : index
    %9 = vector.load %arg8[%c0_9, %c0_10] : memref<1x16xf32, #tpu.memory_space<vmem>>, vector<1x16xf32>
    %10 = vector.broadcast %9 : vector<1x16xf32> to vector<2x16xf32>
    %11 = arith.addf %8, %10 : vector<2x16xf32>
    %c0_11 = arith.constant 0 : index
    %c0_12 = arith.constant 0 : index
    %12 = vector.load %arg3[%c0_11, %c0_12] : memref<16x16xf32, #tpu.memory_space<vmem>>, vector<16x16xf32>
    %cst_13 = arith.constant dense<0.000000e+00> : vector<2x16xf32>
    %13 = tpu.matmul %1, %12, %cst_13 {dimension_numbers = #tpu.dot_dimension_numbers<[1], [0], [0], [1], [0, 0, 1, 1], [], []>} : vector<2x16xf32>, vector<16x16xf32>, vector<2x16xf32> -> vector<2x16xf32>
    %c0_14 = arith.constant 0 : index
    %c0_15 = arith.constant 0 : index
    %14 = vector.load %arg4[%c0_14, %c0_15] : memref<1x16xf32, #tpu.memory_space<vmem>>, vector<1x16xf32>
    %15 = vector.broadcast %14 : vector<1x16xf32> to vector<2x16xf32>
    %16 = arith.addf %13, %15 : vector<2x16xf32>
    %cst_16 = arith.constant 2.500000e-01 : f32
    %17 = vector.broadcast %cst_16 : f32 to vector<2x16xf32>
    %18 = arith.mulf %16, %17 : vector<2x16xf32>
    %cst_17 = arith.constant dense<0xFF800000> : vector<2xf32>
    %19 = vector.multi_reduction <maximumf>, %6, %cst_17 [1] : vector<2x16xf32> to vector<2xf32>
    %20 = vector.shape_cast %19 : vector<2xf32> to vector<2x1xf32>
    %21 = vector.shape_cast %20 : vector<2x1xf32> to vector<2x1x1xf32>
    %cst_18 = arith.constant dense<0x7F800000> : vector<2xf32>
    %22 = vector.multi_reduction <minimumf>, %6, %cst_18 [1] : vector<2x16xf32> to vector<2xf32>
    %23 = vector.shape_cast %22 : vector<2xf32> to vector<2x1xf32>
    %24 = vector.shape_cast %23 : vector<2x1xf32> to vector<2x1x1xf32>
    %25 = vector.shape_cast %18 : vector<2x16xf32> to vector<2x16x1xf32>
    %cst_19 = arith.constant 0.000000e+00 : f32
    %26 = vector.broadcast %cst_19 : f32 to vector<2x16x1xf32>
    %27 = arith.cmpf oge, %25, %26 : vector<2x16x1xf32>
    %28 = vector.broadcast %21 : vector<2x1x1xf32> to vector<2x16x1xf32>
    %29 = arith.mulf %25, %28 : vector<2x16x1xf32>
    %30 = vector.broadcast %24 : vector<2x1x1xf32> to vector<2x16x1xf32>
    %31 = arith.mulf %25, %30 : vector<2x16x1xf32>
    %32 = arith.select %27, %29, %31 : vector<2x16x1xi1>, vector<2x16x1xf32>
    %33 = vector.shape_cast %6 : vector<2x16xf32> to vector<2x1x16xf32>
    %34 = vector.broadcast %25 : vector<2x16x1xf32> to vector<2x16x16xf32>
    %35 = vector.broadcast %33 : vector<2x1x16xf32> to vector<2x16x16xf32>
    %36 = arith.mulf %34, %35 : vector<2x16x16xf32>
    %37 = vector.broadcast %32 : vector<2x16x1xf32> to vector<2x16x16xf32>
    %38 = arith.subf %36, %37 : vector<2x16x16xf32>
    %39 = math.exp %38 : vector<2x16x16xf32>
    %cst_20 = arith.constant dense<0.000000e+00> : vector<2x16xf32>
    %40 = vector.multi_reduction <add>, %39, %cst_20 [2] : vector<2x16x16xf32> to vector<2x16xf32>
    %41 = vector.shape_cast %40 : vector<2x16xf32> to vector<2x16x1xf32>
    %42 = tpu.reciprocal %41 : vector<2x16x1xf32> -> vector<2x16x1xf32>
    %43 = vector.broadcast %42 : vector<2x16x1xf32> to vector<2x16x16xf32>
    %44 = arith.mulf %39, %43 : vector<2x16x16xf32>
    %c0_21 = arith.constant 0 : index
    %c0_22 = arith.constant 0 : index
    %c0_23 = arith.constant 0 : index
    %45 = vector.load %arg11[%c0_21, %c0_22, %c0_23] : memref<2x16x16xf32, #tpu.memory_space<vmem>>, vector<2x16x16xf32>
    tpu.vector_store %arg11[%c0_21, %c0_22, %c0_23], %44 {strides = array<i32>} : memref<2x16x16xf32, #tpu.memory_space<vmem>>, vector<2x16x16xf32>,
    %46 = vector.shape_cast %11 : vector<2x16xf32> to vector<2x1x16xf32>
    %47 = vector.broadcast %46 : vector<2x1x16xf32> to vector<2x16x16xf32>
    %48 = arith.mulf %44, %47 : vector<2x16x16xf32>
    %cst_24 = arith.constant dense<0.000000e+00> : vector<2x16xf32>
    %49 = vector.multi_reduction <add>, %48, %cst_24 [2] : vector<2x16x16xf32> to vector<2x16xf32>
    %c0_25 = arith.constant 0 : index
    %c0_26 = arith.constant 0 : index
    %50 = memref.load %arg9[%c0_25, %c0_26] : memref<1x1xf32, #tpu.memory_space<smem>>
    %51 = vector.broadcast %50 : f32 to vector<2x16xf32>
    %52 = arith.mulf %51, %49 : vector<2x16xf32>
    %53 = arith.addf %52, %1 : vector<2x16xf32>
    %c0_27 = arith.constant 0 : index
    %c0_28 = arith.constant 0 : index
    %c0_29 = arith.constant 0 : index
    %54 = vector.load %arg10[%c0_27, %c0_28, %c0_29] : memref<2x1x16xf32, #tpu.memory_space<vmem>>, vector<2x1x16xf32>
    %55 = vector.shape_cast %54 : vector<2x1x16xf32> to vector<2x16xf32>
    %56 = vector.shape_cast %53 : vector<2x16xf32> to vector<2x1x16xf32>
    tpu.vector_store %arg10[%c0_27, %c0_28, %c0_29], %56 {strides = array<i32>} : memref<2x1x16xf32, #tpu.memory_space<vmem>>, vector<2x1x16xf32>,
    return
  }
  func.func @transform_0(%arg0: i32, %arg1: i32) -> (i32, i32, i32) {
    %c0_i32 = arith.constant 0 : i32
    %c0_i32_0 = arith.constant 0 : i32
    %c0_i32_1 = arith.constant 0 : i32
    return %arg0, %c0_i32, %c0_i32_0 : i32, i32, i32
  }
  func.func @transform_1(%arg0: i32, %arg1: i32) -> (i32, i32) {
    %c0_i32 = arith.constant 0 : i32
    %c0_i32_0 = arith.constant 0 : i32
    return %c0_i32, %arg1 : i32, i32
  }
  func.func @transform_2(%arg0: i32, %arg1: i32) -> (i32, i32) {
    %c0_i32 = arith.constant 0 : i32
    %c0_i32_0 = arith.constant 0 : i32
    return %c0_i32, %arg1 : i32, i32
  }
  func.func @transform_3(%arg0: i32, %arg1: i32) -> (i32, i32) {
    %c0_i32 = arith.constant 0 : i32
    %c0_i32_0 = arith.constant 0 : i32
    %c0_i32_1 = arith.constant 0 : i32
    return %c0_i32, %c0_i32_0 : i32, i32
  }
  func.func @transform_4(%arg0: i32, %arg1: i32) -> (i32, i32) {
    %c0_i32 = arith.constant 0 : i32
    %c0_i32_0 = arith.constant 0 : i32
    %c0_i32_1 = arith.constant 0 : i32
    return %c0_i32, %c0_i32_0 : i32, i32
  }
  func.func @transform_5(%arg0: i32, %arg1: i32) -> (i32, i32) {
    %c0_i32 = arith.constant 0 : i32
    %c0_i32_0 = arith.constant 0 : i32
    %c0_i32_1 = arith.constant 0 : i32
    return %c0_i32, %c0_i32_0 : i32, i32
  }
  func.func @transform_6(%arg0: i32, %arg1: i32) -> (i32, i32) {
    %c0_i32 = arith.constant 0 : i32
    %c0_i32_0 = arith.constant 0 : i32
    %c0_i32_1 = arith.constant 0 : i32
    return %c0_i32, %c0_i32_0 : i32, i32
  }
  func.func @transform_7(%arg0: i32, %arg1: i32) -> (i32, i32) {
    %c0_i32 = arith.constant 0 : i32
    %c0_i32_0 = arith.constant 0 : i32
    %c0_i32_1 = arith.constant 0 : i32
    return %c0_i32, %c0_i32_0 : i32, i32
  }
  func.func @transform_8(%arg0: i32, %arg1: i32) -> (i32, i32, i32) {
    %c0_i32 = arith.constant 0 : i32
    %c0_i32_0 = arith.constant 0 : i32
    return %arg0, %c0_i32, %arg1 : i32, i32, i32
  }
  func.func @transform_9(%arg0: i32, %arg1: i32) -> (i32, i32, i32) {
    %c0_i32 = arith.constant 0 : i32
    %c0_i32_0 = arith.constant 0 : i32
    return %arg0, %arg1, %c0_i32 : i32, i32, i32
  }
}

</mosaic_0001>

<llo_original>
// kernel: tpu_custom_call.1
$region0: #{tpu_custom_call.1}
  #allocation0 [shape = 'u32[]', space=smem, size = 0x4, offset = 0x4, fixed_abs, tag = 'smem constant byte address 0x4 - core index']
  #allocation1 [shape = 'u32[72,128]{1,0:T(1,128)}', space=vmem, size = 0x9000, scoped, tag = 'internal scratch']
  #allocation2 [shape = 'f32[2,16]{1,0:T(2,128)}', space=vmem, size = 0x400, scoped, tag = 'scratch operand']
  #allocation3 [shape = 'f32[2,16]{1,0:T(2,128)}', space=vmem, size = 0x400, scoped, tag = 'scratch operand']
  #allocation4 [shape = 'f32[1,1]{1,0:T(1,128)S(6)}', space=smem, size = 0x200, scoped, tag = 'scoped memory for tpu_custom_call.1']
  %s0 = inlined_call_operand.vmem [shape: f32[2,1,16], index: 0, kind: input, shape index: {}]
  %s1 = inlined_call_operand.hbm [shape: f32[16,16], index: 1, kind: input, shape index: {}]
  %s2 = inlined_call_operand.vmem [shape: f32[1,16], index: 2, kind: input, shape index: {}]
  %s3 = inlined_call_operand.hbm [shape: f32[16,16], index: 3, kind: input, shape index: {}]
  %s4 = inlined_call_operand.vmem [shape: f32[1,16], index: 4, kind: input, shape index: {}]
  %s5 = inlined_call_operand.hbm [shape: f32[16,16], index: 5, kind: input, shape index: {}]
  %s6 = inlined_call_operand.vmem [shape: f32[1,16], index: 6, kind: input, shape index: {}]
  %s7 = inlined_call_operand.<no memory space> [shape: f32[1,1], index: 7, kind: input, shape index: {}]
  %s8 = inlined_call_operand.hbm [shape: f32[2,1,16], index: 8, kind: output, shape index: {0}]
  %s9 = inlined_call_operand.hbm [shape: f32[2,16,16], index: 9, kind: output, shape index: {1}]
  %10 = xla_tuple %s8, %s9
  %s11 = sld [smem:[#allocation0]]
  $region62: #{tpu_custom_call.1} parent=0
    _
  %s13 = ssub.s32 1, %s11
  %s14 = scalar_select 0, %s13, %s11
  %15 = sst [smem:[#allocation4]] %s7
  $region1: #{tpu_custom_call.1} parent=0
    #allocation5 [shape = 'u8[8192]{0}', space=vmem, size = 0x2000, scoped, tag = 'input window, operand 1, single buffered']
    #allocation6 [shape = 's32[1]{0}', space=sflag, size = 0x4, scoped, tag = 'scoped memory for tpu_custom_call.1']
    #allocation7 [shape = 's32[1]{0}', space=sflag, size = 0x4, scoped, tag = 'scoped memory for tpu_custom_call.1']
    #allocation8 [shape = 'u8[8192]{0}', space=vmem, size = 0x2000, scoped, tag = 'input window, operand 3, single buffered']
    #allocation9 [shape = 's32[1]{0}', space=sflag, size = 0x4, scoped, tag = 'scoped memory for tpu_custom_call.1']
    #allocation10 [shape = 'u8[8192]{0}', space=vmem, size = 0x2000, scoped, tag = 'input window, operand 5, single buffered']
    #allocation11 [shape = 'u8[1024]{0}', space=vmem, size = 0x400, scoped, tag = 'output window, operand 0, single buffered']
    #allocation12 [shape = 'u8[16384]{0}', space=vmem, size = 0x4000, scoped, tag = 'output window, operand 1, single buffered']
    #allocation13 [shape = 's32[1]{0}', space=sflag, size = 0x4, scoped, tag = 'scoped memory for tpu_custom_call.1']
    %16 = vsyncpa [#allocation6], 0
    %17 = vsyncpa [#allocation9], 0
    %18 = vsyncpa [#allocation7], 0
    %19 = vsyncpa [#allocation13], 0
    // Predicated region
    $region2: #{tpu_custom_call.1} parent=1 // pred_check
      _
    $region3: #{tpu_custom_call.1} parent=1 // pred_check_branch
      %21 = sbr.rel (0) target = $region5
    $region4: #{tpu_custom_call.1} parent=1 // pred_region
      _
    $region5: #{tpu_custom_call.1} parent=1 // pred_fallthru
      _
    // Predicated region
    $region6: #{tpu_custom_call.1} parent=1 // pred_check
      _
    $region7: #{tpu_custom_call.1} parent=1 // pred_check_branch
      %23 = sbr.rel (0) target = $region9
    $region8: #{tpu_custom_call.1} parent=1 // pred_region
      %25 = vsyncadd [#allocation6], 0
      %s26 = sshll.u32 %s1, 4
      %s27 = int_to_ptr.hbm [resolvable:$true] %s26
      %s28 = sshll.u32 [#allocation5], 4
      %s29 = int_to_ptr.vmem [resolvable:$true] %s28
      %34 = dma.hbm_to_vmem [thread:$0]  %s27, 256, %s29, [#allocation6], 128, 128, 8
    $region9: #{tpu_custom_call.1} parent=1 // pred_fallthru
      _
    // Predicated region
    $region10: #{tpu_custom_call.1} parent=1 // pred_check
      _
    $region11: #{tpu_custom_call.1} parent=1 // pred_check_branch
      %36 = sbr.rel (0) target = $region13
    $region12: #{tpu_custom_call.1} parent=1 // pred_region
      _
    $region13: #{tpu_custom_call.1} parent=1 // pred_fallthru
      _
    // Predicated region
    $region14: #{tpu_custom_call.1} parent=1 // pred_check
      _
    $region15: #{tpu_custom_call.1} parent=1 // pred_check_branch
      %38 = sbr.rel (0) target = $region17
    $region16: #{tpu_custom_call.1} parent=1 // pred_region
      %40 = vsyncadd [#allocation9], 0
      %s41 = sshll.u32 %s3, 4
      %s42 = int_to_ptr.hbm [resolvable:$true] %s41
      %s43 = sshll.u32 [#allocation8], 4
      %s44 = int_to_ptr.vmem [resolvable:$true] %s43
      %49 = dma.hbm_to_vmem [thread:$0]  %s42, 256, %s44, [#allocation9], 128, 128, 8
    $region17: #{tpu_custom_call.1} parent=1 // pred_fallthru
      _
    // Predicated region
    $region18: #{tpu_custom_call.1} parent=1 // pred_check
      _
    $region19: #{tpu_custom_call.1} parent=1 // pred_check_branch
      %51 = sbr.rel (0) target = $region21
    $region20: #{tpu_custom_call.1} parent=1 // pred_region
      _
    $region21: #{tpu_custom_call.1} parent=1 // pred_fallthru
      _
    // Predicated region
    $region22: #{tpu_custom_call.1} parent=1 // pred_check
      _
    $region23: #{tpu_custom_call.1} parent=1 // pred_check_branch
      %53 = sbr.rel (0) target = $region25
    $region24: #{tpu_custom_call.1} parent=1 // pred_region
      %55 = vsyncadd [#allocation9], 0
      %s56 = sshll.u32 %s5, 4
      %s57 = int_to_ptr.hbm [resolvable:$true] %s56
      %s58 = sshll.u32 [#allocation10], 4
      %s59 = int_to_ptr.vmem [resolvable:$true] %s58
      %64 = dma.hbm_to_vmem [thread:$0]  %s57, 256, %s59, [#allocation9], 128, 128, 8
    $region25: #{tpu_custom_call.1} parent=1 // pred_fallthru
      _
    // Predicated region
    $region26: #{tpu_custom_call.1} parent=1 // pred_check
      _
    $region27: #{tpu_custom_call.1} parent=1 // pred_check_branch
      %66 = sbr.rel (0) target = $region29
    $region28: #{tpu_custom_call.1} parent=1 // pred_region
      _
    $region29: #{tpu_custom_call.1} parent=1 // pred_fallthru
      _
    // Predicated region
    $region30: #{tpu_custom_call.1} parent=1 // pred_check
      _
    $region31: #{tpu_custom_call.1} parent=1 // pred_check_branch
      %68 = sbr.rel (0) target = $region33
    $region32: #{tpu_custom_call.1} parent=1 // pred_region
      _
    $region33: #{tpu_custom_call.1} parent=1 // pred_fallthru
      _
    // Predicated region
    $region34: #{tpu_custom_call.1} parent=1 // pred_check
      _
    $region35: #{tpu_custom_call.1} parent=1 // pred_check_branch
      %70 = sbr.rel (0) target = $region37
    $region36: #{tpu_custom_call.1} parent=1 // pred_region
      %72 = dma.done [#allocation6], 256
    $region37: #{tpu_custom_call.1} parent=1 // pred_fallthru
      _
    // Predicated region
    $region38: #{tpu_custom_call.1} parent=1 // pred_check
      _
    $region39: #{tpu_custom_call.1} parent=1 // pred_check_branch
      %74 = sbr.rel (0) target = $region41
    $region40: #{tpu_custom_call.1} parent=1 // pred_region
      %76 = dma.done [#allocation9], 256
    $region41: #{tpu_custom_call.1} parent=1 // pred_fallthru
      _
    // Predicated region
    $region42: #{tpu_custom_call.1} parent=1 // pred_check
      _
    $region43: #{tpu_custom_call.1} parent=1 // pred_check_branch
      %78 = sbr.rel (0) target = $region45
    $region44: #{tpu_custom_call.1} parent=1 // pred_region
      %80 = dma.done [#allocation9], 256
    $region45: #{tpu_custom_call.1} parent=1 // pred_fallthru
      _
    %v81 = vld [vmem:[%s0] sm:$0x1]
    %v82 = vld [vmem:[%s0 + $0x1] sm:$0x1]
    %v83 = vld [vmem:[#allocation8] sm:$0xff]
    %v84 = vld [vmem:[#allocation8 + $0x8] sm:$0xff]
    %v85 = vld [vmem:[%s4] sm:$0x1]
    %v87 = vperm.slane %v85, 0
    %91 = vst [vmem:[#allocation1] ss:$9 sm:$0xff] %v81
    %s92 = scalar_lea.vmem [#allocation1], 1
    %93 = vst [vmem:[%s92] ss:$9 sm:$0xff] %v82
    %v94 = vld [vmem:[#allocation1] sm:$0xff]
    %vm95 = vcmask 130048
    %v96 = vsel %vm95, %v94, 0
    %98 = vmatpush.msra.mxu0 0.0
    %99 = vmatpush.msra.mxu0 0.0
    %100 = vmatpush.msra.mxu0 0.0
    %101 = vmatpush.msra.mxu0 0.0
    %102 = vmatpush.msra.mxu0 0.0
    %103 = vmatpush.msra.mxu0 0.0
    %104 = vmatpush.msra.mxu0 0.0
    %105 = vmatpush.msra.mxu0 0.0
    %106 = vmatpush.msra.mxu0 0.0
    %107 = vmatpush.msra.mxu0 0.0
    %108 = vmatpush.msra.mxu0 0.0
    %109 = vmatpush.msra.mxu0 0.0
    %110 = vmatpush.msra.mxu0 0.0
    %111 = vmatpush.msra.mxu0 0.0
    %112 = vmatpush.msra.mxu0 %v84
    %113 = vmatpush.msra.mxu0 %v83
    %114 = vmatmul.f32.gmra.mxu0 %v96
    %v115 = vpop.f32.mrf.mxu0
    %v116 = vadd.f32 %v87, %v115
    %117 = vdwg.mxu0
    %v118 = vld [vmem:[#allocation10] sm:$0xff]
    %v119 = vld [vmem:[#allocation10 + $0x8] sm:$0xff]
    %v120 = vld [vmem:[%s6] sm:$0x1]
    %v122 = vperm.slane %v120, 0
    %124 = vst [vmem:[#allocation1] ss:$9 sm:$0xff] %v81
    %s125 = scalar_lea.vmem [#allocation1], 1
    %126 = vst [vmem:[%s125] ss:$9 sm:$0xff] %v82
    %v127 = vld [vmem:[#allocation1] sm:$0xff]
    %v128 = vsel %vm95, %v127, 0
    %130 = vmatpush.msra.mxu0 0.0
    %131 = vmatpush.msra.mxu0 0.0
    %132 = vmatpush.msra.mxu0 0.0
    %133 = vmatpush.msra.mxu0 0.0
    %134 = vmatpush.msra.mxu0 0.0
    %135 = vmatpush.msra.mxu0 0.0
    %136 = vmatpush.msra.mxu0 0.0
    %137 = vmatpush.msra.mxu0 0.0
    %138 = vmatpush.msra.mxu0 0.0
    %139 = vmatpush.msra.mxu0 0.0
    %140 = vmatpush.msra.mxu0 0.0
    %141 = vmatpush.msra.mxu0 0.0
    %142 = vmatpush.msra.mxu0 0.0
    %143 = vmatpush.msra.mxu0 0.0
    %144 = vmatpush.msra.mxu0 %v119
    %145 = vmatpush.msra.mxu0 %v118
    %146 = vmatmul.f32.gmra.mxu0 %v128
    %v147 = vpop.f32.mrf.mxu0
    %v148 = vadd.f32 %v122, %v147
    %149 = vdwg.mxu0
    %v150 = vld [vmem:[#allocation5] sm:$0xff]
    %v151 = vld [vmem:[#allocation5 + $0x8] sm:$0xff]
    %v152 = vld [vmem:[%s2] sm:$0x1]
    %v154 = vperm.slane %v152, 0
    %156 = vst [vmem:[#allocation1] ss:$9 sm:$0xff] %v81
    %s157 = scalar_lea.vmem [#allocation1], 1
    %158 = vst [vmem:[%s157] ss:$9 sm:$0xff] %v82
    %v159 = vld [vmem:[#allocation1] sm:$0xff]
    %v160 = vsel %vm95, %v159, 0
    %162 = vmatpush.msra.mxu0 0.0
    %163 = vmatpush.msra.mxu0 0.0
    %164 = vmatpush.msra.mxu0 0.0
    %165 = vmatpush.msra.mxu0 0.0
    %166 = vmatpush.msra.mxu0 0.0
    %167 = vmatpush.msra.mxu0 0.0
    %168 = vmatpush.msra.mxu0 0.0
    %169 = vmatpush.msra.mxu0 0.0
    %170 = vmatpush.msra.mxu0 0.0
    %171 = vmatpush.msra.mxu0 0.0
    %172 = vmatpush.msra.mxu0 0.0
    %173 = vmatpush.msra.mxu0 0.0
    %174 = vmatpush.msra.mxu0 0.0
    %175 = vmatpush.msra.mxu0 0.0
    %176 = vmatpush.msra.mxu0 %v151
    %177 = vmatpush.msra.mxu0 %v150
    %178 = vmatmul.f32.gmra.mxu0 %v160
    %v179 = vpop.f32.mrf.mxu0
    %v180 = vadd.f32 %v154, %v179
    %181 = vdwg.mxu0
    %v182 = vmul.f32 %v180, 0.25
    %vm183 = vcmask 123904
    %v184 = vsel %vm183, %v116, -inf
    %185 = vmax.xlane.f32.xlu0 %v184
    %v186 = vpop.xlane.xlu0 %185
    %v188 = vperm.slane %v186, 0
    %v189 = vperm.slane %v186, 1
    %v192 = vsel %vm183, %v116, inf
    %193 = vmin.xlane.f32.xlu0 %v192
    %v194 = vpop.xlane.xlu0 %193
    %v196 = vperm.slane %v194, 0
    %v197 = vperm.slane %v194, 1
    %v200 = vperm.slane %v182, 0
    %v201 = vlaneseq
    %v202 = vshrl.u32 %v201, 7
    %204 = vset.pattern.permute.xlu0 %v202
    %205 = vperm.xlu0 %204, %v200
    %v206 = vpop.permute.xlu0 %205
    %v207 = vlaneseq
    %v208 = vshrl.u32 %v207, 7
    %v209 = vadd.s32 %v208, 8
    %210 = vset.pattern.permute.xlu0 %v209
    %211 = vperm.xlu0 %210, %v200
    %v212 = vpop.permute.xlu0 %211
    %v213 = vperm.slane %v182, 1
    %v214 = vlaneseq
    %v215 = vshrl.u32 %v214, 7
    %217 = vset.pattern.permute.xlu0 %v215
    %218 = vperm.xlu0 %217, %v213
    %v219 = vpop.permute.xlu0 %218
    %v220 = vlaneseq
    %v221 = vshrl.u32 %v220, 7
    %v222 = vadd.s32 %v221, 8
    %223 = vset.pattern.permute.xlu0 %v222
    %224 = vperm.xlu0 %223, %v213
    %v225 = vpop.permute.xlu0 %224
    %vm226 = vcmp.ge.f32.partialorder %v206, 0.0
    %vm227 = vcmp.ge.f32.partialorder %v212, 0.0
    %vm228 = vcmp.ge.f32.partialorder %v219, 0.0
    %vm229 = vcmp.ge.f32.partialorder %v225, 0.0
    %v230 = vmul.f32 %v206, %v188
    %v231 = vmul.f32 %v212, %v188
    %v232 = vmul.f32 %v219, %v189
    %v233 = vmul.f32 %v225, %v189
    %v234 = vmul.f32 %v206, %v196
    %v235 = vmul.f32 %v212, %v196
    %v236 = vmul.f32 %v219, %v197
    %v237 = vmul.f32 %v225, %v197
    %v238 = vsel %vm226, %v230, %v234
    %v239 = vsel %vm227, %v231, %v235
    %v240 = vsel %vm228, %v232, %v236
    %v241 = vsel %vm229, %v233, %v237
    %v243 = vrot.slane %v116, 1
    %v244 = vperm.slane %v116, 0
    %v245 = vperm.slane %v243, 0
    %v248 = vmul.f32 %v206, %v244
    %v249 = vmul.f32 %v212, %v244
    %v250 = vmul.f32 %v219, %v245
    %v251 = vmul.f32 %v225, %v245
    %v252 = vsub.f32 %v248, %v238
    %v253 = vsub.f32 %v249, %v239
    %v254 = vsub.f32 %v250, %v240
    %v255 = vsub.f32 %v251, %v241
    %v256 = vmul.f32 %v252, 1.442695
    %v257 = vpow.pop %v256
    %v258 = vmul.f32 %v253, 1.442695
    %v259 = vpow.pop %v258
    %v260 = vmul.f32 %v254, 1.442695
    %v261 = vpow.pop %v260
    %v262 = vmul.f32 %v255, 1.442695
    %v263 = vpow.pop %v262
    %v264 = vsel %vm95, %v257, 0.0
    %265 = vadd.xlane.f32.xlu0 %v264
    %v266 = vpop.xlane.xlu0 %265
    %v267 = vsel %vm95, %v259, 0.0
    %268 = vadd.xlane.f32.xlu0 %v267
    %v269 = vpop.xlane.xlu0 %268
    %v270 = vsel %vm95, %v261, 0.0
    %271 = vadd.xlane.f32.xlu0 %v270
    %v272 = vpop.xlane.xlu0 %271
    %v273 = vsel %vm95, %v263, 0.0
    %274 = vadd.xlane.f32.xlu0 %v273
    %v275 = vpop.xlane.xlu0 %274
    %v276 = vrcp.pop %v266
    %v277 = vmul.f32 %v266, %v276
    %v278 = vsub.f32 1.0, %v277
    %v279 = vmul.f32 %v276, %v278
    %v280 = vadd.f32 %v276, %v279
    %vm281 = vweird.f32 %v266
    %vm282 = vweird.f32 %v276
    %vm283 = vmor %vm281, %vm282
    %v284 = vsel %vm283, %v276, %v280
    %v285 = vand.u32 2147483647, %v266
    %vm286 = vcmp.eq.f32.partialorder %v285, 8.507059e+37
    %v287 = vand.u32 %v266, 2147483648
    %v288 = vor.u32 1.1754944e-38, %v287
    %v289 = vsel %vm286, %v288, %v284
    %v290 = vrcp.pop %v269
    %v291 = vmul.f32 %v269, %v290
    %v292 = vsub.f32 1.0, %v291
    %v293 = vmul.f32 %v290, %v292
    %v294 = vadd.f32 %v290, %v293
    %vm295 = vweird.f32 %v269
    %vm296 = vweird.f32 %v290
    %vm297 = vmor %vm295, %vm296
    %v298 = vsel %vm297, %v290, %v294
    %v299 = vand.u32 2147483647, %v269
    %vm300 = vcmp.eq.f32.partialorder %v299, 8.507059e+37
    %v301 = vand.u32 %v269, 2147483648
    %v302 = vor.u32 1.1754944e-38, %v301
    %v303 = vsel %vm300, %v302, %v298
    %v304 = vrcp.pop %v272
    %v305 = vmul.f32 %v272, %v304
    %v306 = vsub.f32 1.0, %v305
    %v307 = vmul.f32 %v304, %v306
    %v308 = vadd.f32 %v304, %v307
    %vm309 = vweird.f32 %v272
    %vm310 = vweird.f32 %v304
    %vm311 = vmor %vm309, %vm310
    %v312 = vsel %vm311, %v304, %v308
    %v313 = vand.u32 2147483647, %v272
    %vm314 = vcmp.eq.f32.partialorder %v313, 8.507059e+37
    %v315 = vand.u32 %v272, 2147483648
    %v316 = vor.u32 1.1754944e-38, %v315
    %v317 = vsel %vm314, %v316, %v312
    %v318 = vrcp.pop %v275
    %v319 = vmul.f32 %v275, %v318
    %v320 = vsub.f32 1.0, %v319
    %v321 = vmul.f32 %v318, %v320
    %v322 = vadd.f32 %v318, %v321
    %vm323 = vweird.f32 %v275
    %vm324 = vweird.f32 %v318
    %vm325 = vmor %vm323, %vm324
    %v326 = vsel %vm325, %v318, %v322
    %v327 = vand.u32 2147483647, %v275
    %vm328 = vcmp.eq.f32.partialorder %v327, 8.507059e+37
    %v329 = vand.u32 %v275, 2147483648
    %v330 = vor.u32 1.1754944e-38, %v329
    %v331 = vsel %vm328, %v330, %v326
    %v332 = vmul.f32 %v257, %v289
    %v333 = vmul.f32 %v259, %v303
    %v334 = vmul.f32 %v261, %v317
    %v335 = vmul.f32 %v263, %v331
    %336 = vst.msk [vmem:[#allocation12] sm:$0xff] %vm95, %v332
    %337 = vst.msk [vmem:[#allocation12 + $0x8] sm:$0xff] %vm95, %v333
    %338 = vst.msk [vmem:[#allocation12 + $0x10] sm:$0xff] %vm95, %v334
    %339 = vst.msk [vmem:[#allocation12 + $0x18] sm:$0xff] %vm95, %v335
    %v341 = vrot.slane %v148, 1
    %v342 = vperm.slane %v148, 0
    %v343 = vperm.slane %v341, 0
    %v346 = vmul.f32 %v332, %v342
    %v347 = vmul.f32 %v333, %v342
    %v348 = vmul.f32 %v334, %v343
    %v349 = vmul.f32 %v335, %v343
    %v350 = vsel %vm95, %v346, 0.0
    %351 = vadd.xlane.f32.xlu0 %v350
    %v352 = vpop.xlane.xlu0 %351
    %v353 = vsel %vm95, %v347, 0.0
    %354 = vadd.xlane.f32.xlu0 %v353
    %v355 = vpop.xlane.xlu0 %354
    %v356 = vsel %vm95, %v348, 0.0
    %357 = vadd.xlane.f32.xlu0 %v356
    %v358 = vpop.xlane.xlu0 %357
    %v359 = vsel %vm95, %v349, 0.0
    %360 = vadd.xlane.f32.xlu0 %v359
    %v361 = vpop.xlane.xlu0 %360
    %s362 = sld [smem:[#allocation4]]
    %v363 = vstv %s362
    %v364 = vmul.f32 %v363, %v352
    %v365 = vmul.f32 %v363, %v355
    %v366 = vmul.f32 %v363, %v358
    %v367 = vmul.f32 %v363, %v361
    %v368 = vperm.slane %v81, 0
    %v369 = vperm.slane %v82, 0
    %v370 = vlaneseq
    %v371 = vshrl.u32 %v370, 7
    %373 = vset.pattern.permute.xlu0 %v371
    %374 = vperm.xlu0 %373, %v368
    %v375 = vpop.permute.xlu0 %374
    %v376 = vlaneseq
    %v377 = vshrl.u32 %v376, 7
    %v378 = vadd.s32 %v377, 8
    %379 = vset.pattern.permute.xlu0 %v378
    %380 = vperm.xlu0 %379, %v368
    %v381 = vpop.permute.xlu0 %380
    %v382 = vlaneseq
    %v383 = vshrl.u32 %v382, 7
    %385 = vset.pattern.permute.xlu0 %v383
    %386 = vperm.xlu0 %385, %v369
    %v387 = vpop.permute.xlu0 %386
    %v388 = vlaneseq
    %v389 = vshrl.u32 %v388, 7
    %v390 = vadd.s32 %v389, 8
    %391 = vset.pattern.permute.xlu0 %v390
    %392 = vperm.xlu0 %391, %v369
    %v393 = vpop.permute.xlu0 %392
    %v398 = vadd.f32 %v364, %v375
    %v399 = vadd.f32 %v365, %v381
    %v400 = vadd.f32 %v366, %v387
    %v401 = vadd.f32 %v367, %v393
    %406 = vset.pattern.permute.xlu0 0
    %407 = vperm.xlu0 %406, %v398
    %v408 = vpop.permute.xlu0 %407
    %409 = vset.pattern.permute.xlu0 0
    %410 = vperm.xlu0 %409, %v399
    %v411 = vpop.permute.xlu0 %410
    %412 = vset.pattern.permute.xlu0 0
    %413 = vperm.xlu0 %412, %v400
    %v414 = vpop.permute.xlu0 %413
    %415 = vset.pattern.permute.xlu0 0
    %416 = vperm.xlu0 %415, %v401
    %v417 = vpop.permute.xlu0 %416
    %v418 = vlaneseq
    %v419 = vand.u32 %v418, 127
    %v420 = vperm.slane %v408, %v419
    %v421 = vadd.s32 %v419, 4294967288
    %v422 = vperm.slane %v411, %v421
    %vm423 = vcmask 130112
    %v424 = vsel %vm423, %v422, %v420
    %v425 = vperm.slane %v414, %v419
    %v426 = vperm.slane %v417, %v421
    %v427 = vsel %vm423, %v426, %v425
    %vm430 = vcmask 122880
    %431 = vst.msk [vmem:[#allocation11] sm:$0x1] %vm430, %v424
    %432 = vst.msk [vmem:[#allocation11 + $0x1] sm:$0x1] %vm430, %v427
    // Predicated region
    $region46: #{tpu_custom_call.1} parent=1 // pred_check
      _
    $region47: #{tpu_custom_call.1} parent=1 // pred_check_branch
      %434 = sbr.rel (0) target = $region49
    $region48: #{tpu_custom_call.1} parent=1 // pred_region
      %436 = vsyncadd [#allocation7], 0
      %s437 = sshll.u32 [#allocation11], 4
      %s438 = int_to_ptr.vmem [resolvable:$true] %s437
      %s439 = sshll.u32 %s8, 4
      %s440 = int_to_ptr.hbm [resolvable:$true] %s439
      %445 = dma.vmem_to_hbm [thread:$0]  %s438, 32, %s440, [#allocation7], 16, 16, 1
    $region49: #{tpu_custom_call.1} parent=1 // pred_fallthru
      _
    // Predicated region
    $region50: #{tpu_custom_call.1} parent=1 // pred_check
      _
    $region51: #{tpu_custom_call.1} parent=1 // pred_check_branch
      %447 = sbr.rel (0) target = $region53
    $region52: #{tpu_custom_call.1} parent=1 // pred_region
      %449 = vsyncadd [#allocation13], 0
      %s450 = sshll.u32 [#allocation12], 4
      %s451 = int_to_ptr.vmem [resolvable:$true] %s450
      %s452 = sshll.u32 %s9, 4
      %s453 = int_to_ptr.hbm [resolvable:$true] %s452
      %458 = dma.vmem_to_hbm [thread:$0]  %s451, 512, %s453, [#allocation13], 128, 128, 8
    $region53: #{tpu_custom_call.1} parent=1 // pred_fallthru
      _
    // Predicated region
    $region54: #{tpu_custom_call.1} parent=1 // pred_check
      _
    $region55: #{tpu_custom_call.1} parent=1 // pred_check_branch
      %460 = sbr.rel (0) target = $region57
    $region56: #{tpu_custom_call.1} parent=1 // pred_region
      %462 = dma.done [#allocation7], 32
    $region57: #{tpu_custom_call.1} parent=1 // pred_fallthru
      _
    // Predicated region
    $region58: #{tpu_custom_call.1} parent=1 // pred_check
      _
    $region59: #{tpu_custom_call.1} parent=1 // pred_check_branch
      %464 = sbr.rel (0) target = $region61
    $region60: #{tpu_custom_call.1} parent=1 // pred_region
      %466 = dma.done [#allocation13], 512
    $region61: #{tpu_custom_call.1} parent=1 // pred_fallthru
      _
    %467 = vsyncpa [#allocation6], 1
    %468 = vsyncpa [#allocation9], 1
    %469 = vsyncpa [#allocation7], 1
    %470 = vsyncpa [#allocation13], 1

</llo_original>
